<compile_context>
chip_gen: v7x
topology: tpu7x:2x2x1
jax: 0.10.0
libtpu: 0.0.40
codegen_flags: <defaults>
</compile_context>

<pallas_src>
import jax
import jax.numpy as jnp
from jax.experimental import pallas as pl
from jax.experimental.pallas import tpu as pltpu


def _round_up(x, m):
    return ((x + m - 1) // m) * m


def _cfed_head_kernel(cls_ref, w_ref, b_ref, o_ref):
    # cls_ref: (TB, H)   f32  CLS rows, DMA'd straight from the token tensor
    # w_ref:   (H, Npad) bf16 fc weight (resident across the batch grid)
    # b_ref:   (1, Npad) f32  fc bias   (resident across the batch grid)
    # o_ref:   (TB, Npad)     logits
    cls = cls_ref[...].astype(jnp.bfloat16)                 # VPU cast, hidden under DMA
    logits = jnp.dot(cls, w_ref[...],
                     preferred_element_type=jnp.float32)    # single-pass bf16 MXU, f32 acc
    o_ref[...] = (logits + b_ref[...]).astype(o_ref.dtype)  # f32 epilogue


def prepare_fc_params(w, b):
    """One-time prep of the fc head: lane-pad numclass to a multiple of 128 and
    cast the weight to bf16.  Hoisted out of the per-call forward path.
    w: (768, numclass), b: (numclass,)."""
    H, numclass = w.shape
    n_pad = _round_up(numclass, 128)
    w_p = jnp.pad(w, ((0, 0), (0, n_pad - numclass))).astype(jnp.bfloat16)       # (H, Npad)
    b_p = jnp.pad(b.astype(jnp.float32), (0, n_pad - numclass)).reshape(1, n_pad)  # (1, Npad)
    return w_p, b_p, numclass


def cfed_forward(x, w_p, b_p, numclass, *, batch_tile=1024,
                 out_dtype=jnp.float32, min_pallas_batch=64):
    """x: (B, S, 768) token features from the backbone; w_p/b_p from prepare_fc_params."""
    B, S, H = x.shape
    n_pad = w_p.shape[1]

    if B < min_pallas_batch:
        # Tiny-batch fallback: the pallas_call fixed cost dominates; let XLA fuse
        # the head into the surrounding graph.  Same numerics as the kernel.
        cls = x[:, 0, :].astype(jnp.bfloat16)
        out = jnp.dot(cls, w_p, preferred_element_type=jnp.float32) + b_p
        return out[:, :numclass].astype(out_dtype)

    # Free (metadata-only) reshape: row-major (B, S, H) -> (B, S*H).  The CLS
    # token of batch row i is exactly columns [0, H) of row i, so the kernel's
    # BlockSpec reads only the CLS rows from HBM -- no wrapper slice/cast/pad.
    x2 = x.reshape(B, S * H)

    b_rows = B
    if b_rows < 8:
        # Pad truly tiny batches up to one full sublane so the single block is
        # dense; negligible cost and only hit when the fallback is disabled.
        x2 = jnp.pad(x2, ((0, 8 - b_rows), (0, 0)))
        b_rows = 8

    # Balanced batch tiles: amortize the ~0.35 us/step pipeline overhead with a
    # big tile, keep >= 2 grid steps when B allows (so v7x's two TensorCores
    # both get work), and derive the tile from B so the masked partial last
    # tile -- not a padded copy -- absorbs any remainder.
    n_tiles = max(pl.cdiv(b_rows, batch_tile), 2 if b_rows >= 16 else 1)
    tb = _round_up(pl.cdiv(b_rows, n_tiles), 8)
    grid = (pl.cdiv(b_rows, tb),)

    # Explicit scoped-VMEM limit: double-buffered CLS + output blocks plus the
    # resident weight/bias, with margin.  Matters on v5e (16 MiB default) once
    # tb grows past ~2048; harmless elsewhere.
    in_itemsize = jnp.dtype(x.dtype).itemsize
    out_itemsize = jnp.dtype(out_dtype).itemsize
    vmem_bytes = (2 * tb * (H * in_itemsize + n_pad * out_itemsize)
                  + 2 * (H * n_pad * 2 + n_pad * 4))
    vmem_limit = min(max(int(vmem_bytes * 1.5), 16 << 20), 48 << 20)

    out = pl.pallas_call(
        _cfed_head_kernel,
        out_shape=jax.ShapeDtypeStruct((b_rows, n_pad), out_dtype),
        grid_spec=pltpu.PrefetchScalarGridSpec(
            num_scalar_prefetch=0,
            grid=grid,
            in_specs=[
                # CLS rows only: block (tb, H) at column-block 0 of (B, S*H).
                pl.BlockSpec((tb, H), lambda i: (i, 0)),
                pl.BlockSpec((H, n_pad), lambda i: (0, 0)),   # weight: resident
                pl.BlockSpec((1, n_pad), lambda i: (0, 0)),   # bias:   resident
            ],
            out_specs=pl.BlockSpec((tb, n_pad), lambda i: (i, 0)),
        ),
        compiler_params=pltpu.CompilerParams(
            dimension_semantics=("parallel",),
            vmem_limit_bytes=vmem_limit,
        ),
    )(x2, w_p, b_p)

    return out[:B, :numclass]


if __name__ == "__main__":
    key = jax.random.PRNGKey(0)
    S, H = 8, 768                 # hidden dim fixed at 768 by the module
    numclass = 10
    B_small, B_big = 2, 200

    kx, kw, kb = jax.random.split(key, 3)
    # Backbone output stand-in (what `self.feature(input)[0]` would produce).
    x_big = jax.random.normal(kx, (B_big, S, H), dtype=jnp.float32)
    x_small = x_big[:B_small]

    # Deterministic fc init (PyTorch-style uniform bound 1/sqrt(in_features)).
    bound = 1.0 / (H ** 0.5)
    w = jax.random.uniform(kw, (H, numclass), jnp.float32, -bound, bound)
    b = jax.random.uniform(kb, (numclass,), jnp.float32, -bound, bound)

    w_p, b_p, nc = prepare_fc_params(w, b)   # one-time head prep (hoisted)

    def ref(xx):                              # plain f32 reference
        return xx[:, 0, :] @ w + b

    def ref_bf16(xx):                         # bf16-rounded-input reference (kernel numerics)
        return (xx[:, 0, :].astype(jnp.bfloat16).astype(jnp.float32)
                @ w.astype(jnp.bfloat16).astype(jnp.float32)) + b

    # 1) Small batch forced through the Pallas kernel (single grid step).
    out_small = cfed_forward(x_small, w_p, b_p, nc, min_pallas_batch=0)
    jax.block_until_ready(out_small)
    assert out_small.shape == (B_small, numclass)
    assert jnp.allclose(out_small, ref(x_small), atol=2e-2, rtol=2e-2)
    assert jnp.allclose(out_small, ref_bf16(x_small), atol=1e-3, rtol=1e-3)

    # 2) Larger batch: 2-step "parallel" grid with a masked partial last tile.
    out_big = cfed_forward(x_big, w_p, b_p, nc)
    jax.block_until_ready(out_big)
    assert out_big.shape == (B_big, numclass)
    assert jnp.allclose(out_big, ref(x_big), atol=2e-2, rtol=2e-2)
    assert jnp.allclose(out_big, ref_bf16(x_big), atol=1e-3, rtol=1e-3)

    # 3) Tiny-batch fallback path (plain fused matmul; same numerics).
    out_fb = cfed_forward(x_small, w_p, b_p, nc, min_pallas_batch=64)
    jax.block_until_ready(out_fb)
    assert out_fb.shape == (B_small, numclass)
    assert jnp.allclose(out_fb, ref_bf16(x_small), atol=1e-3, rtol=1e-3)

    print("KERNEL_OK")
</pallas_src>

<mosaic_0001>
module attributes {stable_mosaic.version = 11 : i64} {
  func.func @_cfed_head_kernel(%arg0: i32, %arg1: memref<8x768xf32, #tpu.memory_space<vmem>>, %arg2: memref<768x128xbf16, #tpu.memory_space<vmem>>, %arg3: memref<1x128xf32, #tpu.memory_space<vmem>>, %arg4: memref<8x128xf32, #tpu.memory_space<vmem>>) attributes {dimension_semantics = [#tpu.dimension_semantics<parallel>], iteration_bounds = array<i64: 1>, scalar_prefetch = 0 : i64, scratch_operands = 0 : i64, tpu.core_type = #tpu.core_type<tc>, window_params = [{transform_indices = @transform_0, window_bounds = array<i64: 8, 768>}, {pipeline_mode = #tpu.pipeline_mode<synchronous>, transform_indices = @transform_1, window_bounds = array<i64: 768, 128>}, {pipeline_mode = #tpu.pipeline_mode<synchronous>, transform_indices = @transform_2, window_bounds = array<i64: 1, 128>}, {transform_indices = @transform_3, window_bounds = array<i64: 8, 128>}]} {
    %c0 = arith.constant 0 : index
    %c0_0 = arith.constant 0 : index
    %0 = vector.load %arg1[%c0, %c0_0] : memref<8x768xf32, #tpu.memory_space<vmem>>, vector<8x768xf32>
    %1 = arith.truncf %0 : vector<8x768xf32> to vector<8x768xbf16>
    %c0_1 = arith.constant 0 : index
    %c0_2 = arith.constant 0 : index
    %2 = vector.load %arg2[%c0_1, %c0_2] : memref<768x128xbf16, #tpu.memory_space<vmem>>, vector<768x128xbf16>
    %cst = arith.constant dense<0.000000e+00> : vector<8x128xf32>
    %3 = tpu.matmul %1, %2, %cst {dimension_numbers = #tpu.dot_dimension_numbers<[1], [0], [0], [1], [0, 0, 1, 1], [], []>} : vector<8x768xbf16>, vector<768x128xbf16>, vector<8x128xf32> -> vector<8x128xf32>
    %c0_3 = arith.constant 0 : index
    %c0_4 = arith.constant 0 : index
    %4 = vector.load %arg3[%c0_3, %c0_4] : memref<1x128xf32, #tpu.memory_space<vmem>>, vector<1x128xf32>
    %5 = vector.broadcast %4 : vector<1x128xf32> to vector<8x128xf32>
    %6 = arith.addf %3, %5 : vector<8x128xf32>
    %c0_5 = arith.constant 0 : index
    %c0_6 = arith.constant 0 : index
    %7 = vector.load %arg4[%c0_5, %c0_6] : memref<8x128xf32, #tpu.memory_space<vmem>>, vector<8x128xf32>
    tpu.vector_store %arg4[%c0_5, %c0_6], %6 {strides = array<i32>} : memref<8x128xf32, #tpu.memory_space<vmem>>, vector<8x128xf32>,
    return
  }
  func.func @transform_0(%arg0: i32) -> (i32, i32) {
    %c0_i32 = arith.constant 0 : i32
    %c0_i32_0 = arith.constant 0 : i32
    return %arg0, %c0_i32 : i32, i32
  }
  func.func @transform_1(%arg0: i32) -> (i32, i32) {
    %c0_i32 = arith.constant 0 : i32
    %c0_i32_0 = arith.constant 0 : i32
    %c0_i32_1 = arith.constant 0 : i32
    return %c0_i32, %c0_i32_0 : i32, i32
  }
  func.func @transform_2(%arg0: i32) -> (i32, i32) {
    %c0_i32 = arith.constant 0 : i32
    %c0_i32_0 = arith.constant 0 : i32
    %c0_i32_1 = arith.constant 0 : i32
    return %c0_i32, %c0_i32_0 : i32, i32
  }
  func.func @transform_3(%arg0: i32) -> (i32, i32) {
    %c0_i32 = arith.constant 0 : i32
    %c0_i32_0 = arith.constant 0 : i32
    return %arg0, %c0_i32 : i32, i32
  }
}

</mosaic_0001>

<llo_original>
// kernel: tpu_custom_call.1
$region0: #{tpu_custom_call.1}
  #allocation0 [shape = 'u32[]', space=smem, size = 0x4, offset = 0x4, fixed_abs, tag = 'smem constant byte address 0x4 - core index']
  #allocation1 [shape = 'u32[144,128]{1,0:T(1,128)}', space=vmem, size = 0x12000, scoped, tag = 'internal scratch']
  %s0 = inlined_call_operand.hbm [shape: f32[8,6144], index: 0, kind: input, shape index: {}]
  %s1 = inlined_call_operand.hbm [shape: bf16[768,128], index: 1, kind: input, shape index: {}]
  %s2 = inlined_call_operand.vmem [shape: f32[1,128], index: 2, kind: input, shape index: {}]
  %s3 = inlined_call_operand.hbm [shape: f32[8,128], index: 3, kind: output, shape index: {}]
  %s4 = sld [smem:[#allocation0]]
  $region30: #{tpu_custom_call.1} parent=0
    _
  %s6 = ssub.s32 1, %s4
  %s7 = scalar_select 0, %s6, %s4
  $region1: #{tpu_custom_call.1} parent=0
    #allocation2 [shape = 'u8[24576]{0}', space=vmem, size = 0x6000, scoped, tag = 'input window, operand 0, single buffered']
    #allocation3 [shape = 's32[1]{0}', space=sflag, size = 0x4, scoped, tag = 'scoped memory for tpu_custom_call.1']
    #allocation4 [shape = 's32[1]{0}', space=sflag, size = 0x4, scoped, tag = 'scoped memory for tpu_custom_call.1']
    #allocation5 [shape = 'u8[196608]{0}', space=vmem, size = 0x30000, scoped, tag = 'input window, operand 1, single buffered']
    #allocation6 [shape = 's32[1]{0}', space=sflag, size = 0x4, scoped, tag = 'scoped memory for tpu_custom_call.1']
    #allocation7 [shape = 'u8[4096]{0}', space=vmem, size = 0x1000, scoped, tag = 'output window, operand 0, single buffered']
    %8 = vsyncpa [#allocation3], 0
    %9 = vsyncpa [#allocation6], 0
    %10 = vsyncpa [#allocation4], 0
    // Predicated region
    $region2: #{tpu_custom_call.1} parent=1 // pred_check
      _
    $region3: #{tpu_custom_call.1} parent=1 // pred_check_branch
      %12 = sbr.rel (0) target = $region5
    $region4: #{tpu_custom_call.1} parent=1 // pred_region
      %s14 = ssub.s32 768, 768
      %15 = vsyncadd [#allocation3], %s14
      %s17 = sshll.u32 [#allocation2], 4
      %s18 = int_to_ptr.vmem [resolvable:$true] %s17
      %20 = dma.hbm_to_vmem [thread:$0]  %s0, 768, %s18, [#allocation3]
    $region5: #{tpu_custom_call.1} parent=1 // pred_fallthru
      _
    // Predicated region
    $region6: #{tpu_custom_call.1} parent=1 // pred_check
      _
    $region7: #{tpu_custom_call.1} parent=1 // pred_check_branch
      %22 = sbr.rel (0) target = $region9
    $region8: #{tpu_custom_call.1} parent=1 // pred_region
      %s24 = ssub.s32 6144, 6144
      %25 = vsyncadd [#allocation6], %s24
      %s26 = sshll.u32 [#allocation5], 4
      %s27 = int_to_ptr.vmem [resolvable:$true] %s26
      %32 = dma.hbm_to_vmem [thread:$0]  %s1, 6144, %s27, [#allocation6], 64, 64, 4
    $region9: #{tpu_custom_call.1} parent=1 // pred_fallthru
      _
    // Predicated region
    $region10: #{tpu_custom_call.1} parent=1 // pred_check
      _
    $region11: #{tpu_custom_call.1} parent=1 // pred_check_branch
      %34 = sbr.rel (0) target = $region13
    $region12: #{tpu_custom_call.1} parent=1 // pred_region
      _
    $region13: #{tpu_custom_call.1} parent=1 // pred_fallthru
      _
    // Predicated region
    $region14: #{tpu_custom_call.1} parent=1 // pred_check
      _
    $region15: #{tpu_custom_call.1} parent=1 // pred_check_branch
      %36 = sbr.rel (0) target = $region17
    $region16: #{tpu_custom_call.1} parent=1 // pred_region
      %37 = dma.done [#allocation3], 768
    $region17: #{tpu_custom_call.1} parent=1 // pred_fallthru
      _
    // Predicated region
    $region18: #{tpu_custom_call.1} parent=1 // pred_check
      _
    $region19: #{tpu_custom_call.1} parent=1 // pred_check_branch
      %39 = sbr.rel (0) target = $region21
    $region20: #{tpu_custom_call.1} parent=1 // pred_region
      %40 = dma.done [#allocation6], 6144
    $region21: #{tpu_custom_call.1} parent=1 // pred_fallthru
      _
    %v42 = vld [vmem:[#allocation2] sm:$0xff]
    %v43 = vld [vmem:[#allocation2 + $0x8] sm:$0xff]
    %v44 = vld [vmem:[#allocation2 + $0x10] sm:$0xff]
    %v45 = vld [vmem:[#allocation2 + $0x18] sm:$0xff]
    %v46 = vld [vmem:[#allocation2 + $0x20] sm:$0xff]
    %v47 = vld [vmem:[#allocation2 + $0x28] sm:$0xff]
    %v48 = vpack.c.bf16 %v42, %v42
    %v49 = vpack.c.bf16 %v43, %v43
    %v50 = vpack.c.bf16 %v44, %v44
    %v51 = vpack.c.bf16 %v45, %v45
    %v52 = vpack.c.bf16 %v46, %v46
    %v53 = vpack.c.bf16 %v47, %v47
    %v54 = vld [vmem:[#allocation5] sm:$0xf]
    %v55 = vld [vmem:[#allocation5 + $0x4] sm:$0xf]
    %v56 = vld [vmem:[#allocation5 + $0x8] sm:$0xf]
    %v57 = vld [vmem:[#allocation5 + $0xc] sm:$0xf]
    %v58 = vld [vmem:[#allocation5 + $0x10] sm:$0xf]
    %v59 = vld [vmem:[#allocation5 + $0x14] sm:$0xf]
    %v60 = vld [vmem:[#allocation5 + $0x18] sm:$0xf]
    %v61 = vld [vmem:[#allocation5 + $0x1c] sm:$0xf]
    %v62 = vld [vmem:[#allocation5 + $0x20] sm:$0xf]
    %v63 = vld [vmem:[#allocation5 + $0x24] sm:$0xf]
    %v64 = vld [vmem:[#allocation5 + $0x28] sm:$0xf]
    %v65 = vld [vmem:[#allocation5 + $0x2c] sm:$0xf]
    %v66 = vld [vmem:[#allocation5 + $0x30] sm:$0xf]
    %v67 = vld [vmem:[#allocation5 + $0x34] sm:$0xf]
    %v68 = vld [vmem:[#allocation5 + $0x38] sm:$0xf]
    %v69 = vld [vmem:[#allocation5 + $0x3c] sm:$0xf]
    %v70 = vld [vmem:[#allocation5 + $0x40] sm:$0xf]
    %v71 = vld [vmem:[#allocation5 + $0x44] sm:$0xf]
    %v72 = vld [vmem:[#allocation5 + $0x48] sm:$0xf]
    %v73 = vld [vmem:[#allocation5 + $0x4c] sm:$0xf]
    %v74 = vld [vmem:[#allocation5 + $0x50] sm:$0xf]
    %v75 = vld [vmem:[#allocation5 + $0x54] sm:$0xf]
    %v76 = vld [vmem:[#allocation5 + $0x58] sm:$0xf]
    %v77 = vld [vmem:[#allocation5 + $0x5c] sm:$0xf]
    %v78 = vld [vmem:[#allocation5 + $0x60] sm:$0xf]
    %v79 = vld [vmem:[#allocation5 + $0x64] sm:$0xf]
    %v80 = vld [vmem:[#allocation5 + $0x68] sm:$0xf]
    %v81 = vld [vmem:[#allocation5 + $0x6c] sm:$0xf]
    %v82 = vld [vmem:[#allocation5 + $0x70] sm:$0xf]
    %v83 = vld [vmem:[#allocation5 + $0x74] sm:$0xf]
    %v84 = vld [vmem:[#allocation5 + $0x78] sm:$0xf]
    %v85 = vld [vmem:[#allocation5 + $0x7c] sm:$0xf]
    %v86 = vld [vmem:[#allocation5 + $0x80] sm:$0xf]
    %v87 = vld [vmem:[#allocation5 + $0x84] sm:$0xf]
    %v88 = vld [vmem:[#allocation5 + $0x88] sm:$0xf]
    %v89 = vld [vmem:[#allocation5 + $0x8c] sm:$0xf]
    %v90 = vld [vmem:[#allocation5 + $0x90] sm:$0xf]
    %v91 = vld [vmem:[#allocation5 + $0x94] sm:$0xf]
    %v92 = vld [vmem:[#allocation5 + $0x98] sm:$0xf]
    %v93 = vld [vmem:[#allocation5 + $0x9c] sm:$0xf]
    %v94 = vld [vmem:[#allocation5 + $0xa0] sm:$0xf]
    %v95 = vld [vmem:[#allocation5 + $0xa4] sm:$0xf]
    %v96 = vld [vmem:[#allocation5 + $0xa8] sm:$0xf]
    %v97 = vld [vmem:[#allocation5 + $0xac] sm:$0xf]
    %v98 = vld [vmem:[#allocation5 + $0xb0] sm:$0xf]
    %v99 = vld [vmem:[#allocation5 + $0xb4] sm:$0xf]
    %v100 = vld [vmem:[#allocation5 + $0xb8] sm:$0xf]
    %v101 = vld [vmem:[#allocation5 + $0xbc] sm:$0xf]
    %v102 = vld [vmem:[#allocation5 + $0xc0] sm:$0xf]
    %v103 = vld [vmem:[#allocation5 + $0xc4] sm:$0xf]
    %v104 = vld [vmem:[#allocation5 + $0xc8] sm:$0xf]
    %v105 = vld [vmem:[#allocation5 + $0xcc] sm:$0xf]
    %v106 = vld [vmem:[#allocation5 + $0xd0] sm:$0xf]
    %v107 = vld [vmem:[#allocation5 + $0xd4] sm:$0xf]
    %v108 = vld [vmem:[#allocation5 + $0xd8] sm:$0xf]
    %v109 = vld [vmem:[#allocation5 + $0xdc] sm:$0xf]
    %v110 = vld [vmem:[#allocation5 + $0xe0] sm:$0xf]
    %v111 = vld [vmem:[#allocation5 + $0xe4] sm:$0xf]
    %v112 = vld [vmem:[#allocation5 + $0xe8] sm:$0xf]
    %v113 = vld [vmem:[#allocation5 + $0xec] sm:$0xf]
    %v114 = vld [vmem:[#allocation5 + $0xf0] sm:$0xf]
    %v115 = vld [vmem:[#allocation5 + $0xf4] sm:$0xf]
    %v116 = vld [vmem:[#allocation5 + $0xf8] sm:$0xf]
    %v117 = vld [vmem:[#allocation5 + $0xfc] sm:$0xf]
    %v118 = vld [vmem:[#allocation5 + $0x100] sm:$0xf]
    %v119 = vld [vmem:[#allocation5 + $0x104] sm:$0xf]
    %v120 = vld [vmem:[#allocation5 + $0x108] sm:$0xf]
    %v121 = vld [vmem:[#allocation5 + $0x10c] sm:$0xf]
    %v122 = vld [vmem:[#allocation5 + $0x110] sm:$0xf]
    %v123 = vld [vmem:[#allocation5 + $0x114] sm:$0xf]
    %v124 = vld [vmem:[#allocation5 + $0x118] sm:$0xf]
    %v125 = vld [vmem:[#allocation5 + $0x11c] sm:$0xf]
    %v126 = vld [vmem:[#allocation5 + $0x120] sm:$0xf]
    %v127 = vld [vmem:[#allocation5 + $0x124] sm:$0xf]
    %v128 = vld [vmem:[#allocation5 + $0x128] sm:$0xf]
    %v129 = vld [vmem:[#allocation5 + $0x12c] sm:$0xf]
    %v130 = vld [vmem:[#allocation5 + $0x130] sm:$0xf]
    %v131 = vld [vmem:[#allocation5 + $0x134] sm:$0xf]
    %v132 = vld [vmem:[#allocation5 + $0x138] sm:$0xf]
    %v133 = vld [vmem:[#allocation5 + $0x13c] sm:$0xf]
    %v134 = vld [vmem:[#allocation5 + $0x140] sm:$0xf]
    %v135 = vld [vmem:[#allocation5 + $0x144] sm:$0xf]
    %v136 = vld [vmem:[#allocation5 + $0x148] sm:$0xf]
    %v137 = vld [vmem:[#allocation5 + $0x14c] sm:$0xf]
    %v138 = vld [vmem:[#allocation5 + $0x150] sm:$0xf]
    %v139 = vld [vmem:[#allocation5 + $0x154] sm:$0xf]
    %v140 = vld [vmem:[#allocation5 + $0x158] sm:$0xf]
    %v141 = vld [vmem:[#allocation5 + $0x15c] sm:$0xf]
    %v142 = vld [vmem:[#allocation5 + $0x160] sm:$0xf]
    %v143 = vld [vmem:[#allocation5 + $0x164] sm:$0xf]
    %v144 = vld [vmem:[#allocation5 + $0x168] sm:$0xf]
    %v145 = vld [vmem:[#allocation5 + $0x16c] sm:$0xf]
    %v146 = vld [vmem:[#allocation5 + $0x170] sm:$0xf]
    %v147 = vld [vmem:[#allocation5 + $0x174] sm:$0xf]
    %v148 = vld [vmem:[#allocation5 + $0x178] sm:$0xf]
    %v149 = vld [vmem:[#allocation5 + $0x17c] sm:$0xf]
    %v150 = vld [vmem:[%s2] sm:$0x1]
    %v152 = vlaneseq
    %v153 = vshrl.u32 %v152, 7
    %v154 = vsub.s32 0, %v153
    %v155 = vrot.slane %v150, %v154
    %v253 = vunpack.c.l.b16 %v54
    %v254 = vunpack.c.l.b16 %v55
    %v255 = vunpack.c.l.b16 %v56
    %v256 = vunpack.c.l.b16 %v57
    %v257 = vunpack.c.l.b16 %v58
    %v258 = vunpack.c.l.b16 %v59
    %v259 = vunpack.c.l.b16 %v60
    %v260 = vunpack.c.l.b16 %v61
    %v261 = vunpack.c.l.b16 %v62
    %v262 = vunpack.c.l.b16 %v63
    %v263 = vunpack.c.l.b16 %v64
    %v264 = vunpack.c.l.b16 %v65
    %v265 = vunpack.c.l.b16 %v66
    %v266 = vunpack.c.l.b16 %v67
    %v267 = vunpack.c.l.b16 %v68
    %v268 = vunpack.c.l.b16 %v69
    %v269 = vunpack.c.l.b16 %v70
    %v270 = vunpack.c.l.b16 %v71
    %v271 = vunpack.c.l.b16 %v72
    %v272 = vunpack.c.l.b16 %v73
    %v273 = vunpack.c.l.b16 %v74
    %v274 = vunpack.c.l.b16 %v75
    %v275 = vunpack.c.l.b16 %v76
    %v276 = vunpack.c.l.b16 %v77
    %v277 = vunpack.c.l.b16 %v78
    %v278 = vunpack.c.l.b16 %v79
    %v279 = vunpack.c.l.b16 %v80
    %v280 = vunpack.c.l.b16 %v81
    %v281 = vunpack.c.l.b16 %v82
    %v282 = vunpack.c.l.b16 %v83
    %v283 = vunpack.c.l.b16 %v84
    %v284 = vunpack.c.l.b16 %v85
    %v285 = vunpack.c.l.b16 %v86
    %v286 = vunpack.c.l.b16 %v87
    %v287 = vunpack.c.l.b16 %v88
    %v288 = vunpack.c.l.b16 %v89
    %v289 = vunpack.c.l.b16 %v90
    %v290 = vunpack.c.l.b16 %v91
    %v291 = vunpack.c.l.b16 %v92
    %v292 = vunpack.c.l.b16 %v93
    %v293 = vunpack.c.l.b16 %v94
    %v294 = vunpack.c.l.b16 %v95
    %v295 = vunpack.c.l.b16 %v96
    %v296 = vunpack.c.l.b16 %v97
    %v297 = vunpack.c.l.b16 %v98
    %v298 = vunpack.c.l.b16 %v99
    %v299 = vunpack.c.l.b16 %v100
    %v300 = vunpack.c.l.b16 %v101
    %v301 = vunpack.c.l.b16 %v102
    %v302 = vunpack.c.l.b16 %v103
    %v303 = vunpack.c.l.b16 %v104
    %v304 = vunpack.c.l.b16 %v105
    %v305 = vunpack.c.l.b16 %v106
    %v306 = vunpack.c.l.b16 %v107
    %v307 = vunpack.c.l.b16 %v108
    %v308 = vunpack.c.l.b16 %v109
    %v309 = vunpack.c.l.b16 %v110
    %v310 = vunpack.c.l.b16 %v111
    %v311 = vunpack.c.l.b16 %v112
    %v312 = vunpack.c.l.b16 %v113
    %v313 = vunpack.c.l.b16 %v114
    %v314 = vunpack.c.l.b16 %v115
    %v315 = vunpack.c.l.b16 %v116
    %v316 = vunpack.c.l.b16 %v117
    %v317 = vunpack.c.l.b16 %v118
    %v318 = vunpack.c.l.b16 %v119
    %v319 = vunpack.c.l.b16 %v120
    %v320 = vunpack.c.l.b16 %v121
    %v321 = vunpack.c.l.b16 %v122
    %v322 = vunpack.c.l.b16 %v123
    %v323 = vunpack.c.l.b16 %v124
    %v324 = vunpack.c.l.b16 %v125
    %v325 = vunpack.c.l.b16 %v126
    %v326 = vunpack.c.l.b16 %v127
    %v327 = vunpack.c.l.b16 %v128
    %v328 = vunpack.c.l.b16 %v129
    %v329 = vunpack.c.l.b16 %v130
    %v330 = vunpack.c.l.b16 %v131
    %v331 = vunpack.c.l.b16 %v132
    %v332 = vunpack.c.l.b16 %v133
    %v333 = vunpack.c.l.b16 %v134
    %v334 = vunpack.c.l.b16 %v135
    %v335 = vunpack.c.l.b16 %v136
    %v336 = vunpack.c.l.b16 %v137
    %v337 = vunpack.c.l.b16 %v138
    %v338 = vunpack.c.l.b16 %v139
    %v339 = vunpack.c.l.b16 %v140
    %v340 = vunpack.c.l.b16 %v141
    %v341 = vunpack.c.l.b16 %v142
    %v342 = vunpack.c.l.b16 %v143
    %v343 = vunpack.c.l.b16 %v144
    %v344 = vunpack.c.l.b16 %v145
    %v345 = vunpack.c.l.b16 %v146
    %v346 = vunpack.c.l.b16 %v147
    %v347 = vunpack.c.l.b16 %v148
    %v348 = vunpack.c.l.b16 %v149
    %v349 = vpack.c.b16 %v254, %v253
    %v350 = vpack.c.b16 %v256, %v255
    %v351 = vpack.c.b16 %v258, %v257
    %v352 = vpack.c.b16 %v260, %v259
    %v353 = vpack.c.b16 %v262, %v261
    %v354 = vpack.c.b16 %v264, %v263
    %v355 = vpack.c.b16 %v266, %v265
    %v356 = vpack.c.b16 %v268, %v267
    %v357 = vpack.c.b16 %v270, %v269
    %v358 = vpack.c.b16 %v272, %v271
    %v359 = vpack.c.b16 %v274, %v273
    %v360 = vpack.c.b16 %v276, %v275
    %v361 = vpack.c.b16 %v278, %v277
    %v362 = vpack.c.b16 %v280, %v279
    %v363 = vpack.c.b16 %v282, %v281
    %v364 = vpack.c.b16 %v284, %v283
    %v365 = vpack.c.b16 %v286, %v285
    %v366 = vpack.c.b16 %v288, %v287
    %v367 = vpack.c.b16 %v290, %v289
    %v368 = vpack.c.b16 %v292, %v291
    %v369 = vpack.c.b16 %v294, %v293
    %v370 = vpack.c.b16 %v296, %v295
    %v371 = vpack.c.b16 %v298, %v297
    %v372 = vpack.c.b16 %v300, %v299
    %v373 = vpack.c.b16 %v302, %v301
    %v374 = vpack.c.b16 %v304, %v303
    %v375 = vpack.c.b16 %v306, %v305
    %v376 = vpack.c.b16 %v308, %v307
    %v377 = vpack.c.b16 %v310, %v309
    %v378 = vpack.c.b16 %v312, %v311
    %v379 = vpack.c.b16 %v314, %v313
    %v380 = vpack.c.b16 %v316, %v315
    %v381 = vpack.c.b16 %v318, %v317
    %v382 = vpack.c.b16 %v320, %v319
    %v383 = vpack.c.b16 %v322, %v321
    %v384 = vpack.c.b16 %v324, %v323
    %v385 = vpack.c.b16 %v326, %v325
    %v386 = vpack.c.b16 %v328, %v327
    %v387 = vpack.c.b16 %v330, %v329
    %v388 = vpack.c.b16 %v332, %v331
    %v389 = vpack.c.b16 %v334, %v333
    %v390 = vpack.c.b16 %v336, %v335
    %v391 = vpack.c.b16 %v338, %v337
    %v392 = vpack.c.b16 %v340, %v339
    %v393 = vpack.c.b16 %v342, %v341
    %v394 = vpack.c.b16 %v344, %v343
    %v395 = vpack.c.b16 %v346, %v345
    %v396 = vpack.c.b16 %v348, %v347
    %445 = vmatprep.subr.bf16.mxu0 0
    %446 = vmatpush1.bf16.msra.mxu0 %v349
    %447 = vmatprep.subr.bf16.mxu0 0
    %448 = vmatpush1.bf16.msra.mxu0 %v350
    %449 = vmatprep.subr.bf16.mxu0 0
    %450 = vmatpush1.bf16.msra.mxu0 %v351
    %451 = vmatprep.subr.bf16.mxu0 0
    %452 = vmatpush1.bf16.msra.mxu0 %v352
    %453 = vmatprep.subr.bf16.mxu0 0
    %454 = vmatpush1.bf16.msra.mxu0 %v353
    %455 = vmatprep.subr.bf16.mxu0 0
    %456 = vmatpush1.bf16.msra.mxu0 %v354
    %457 = vmatprep.subr.bf16.mxu0 0
    %458 = vmatpush1.bf16.msra.mxu0 %v355
    %459 = vmatprep.subr.bf16.mxu0 0
    %460 = vmatpush1.bf16.msra.mxu0 %v356
    %461 = vmatprep.subr.bf16.mxu0 0
    %462 = vmatpush1.bf16.msra.mxu0 %v357
    %463 = vmatprep.subr.bf16.mxu0 0
    %464 = vmatpush1.bf16.msra.mxu0 %v358
    %465 = vmatprep.subr.bf16.mxu0 0
    %466 = vmatpush1.bf16.msra.mxu0 %v359
    %467 = vmatprep.subr.bf16.mxu0 0
    %468 = vmatpush1.bf16.msra.mxu0 %v360
    %469 = vmatprep.subr.bf16.mxu0 0
    %470 = vmatpush1.bf16.msra.mxu0 %v361
    %471 = vmatprep.subr.bf16.mxu0 0
    %472 = vmatpush1.bf16.msra.mxu0 %v362
    %473 = vmatprep.subr.bf16.mxu0 0
    %474 = vmatpush1.bf16.msra.mxu0 %v363
    %475 = vmatprep.subr.bf16.mxu0 0
    %476 = vmatpush1.bf16.msra.mxu0 %v364
    %477 = vmatprep.mubr.bf16.mxu0 %v49
    %478 = vmatmul.mubr.bf16.gmra.mrb[0].mxu0 %v48
    %v479 = vpop.f32.mrb[0].mxu0
    %v480 = vadd.f32 %v155, %v479
    %v481 = vpop.f32.mrb[0].mxu0
    %v482 = vpop.f32.mrb[0].mxu0
    %v483 = vpop.f32.mrb[0].mxu0
    %484 = vdwg.mxu0
    %485 = vmatprep.subr.bf16.mxu0 0
    %486 = vmatpush1.bf16.msra.mxu0 %v365
    %487 = vmatprep.subr.bf16.mxu0 0
    %488 = vmatpush1.bf16.msra.mxu0 %v366
    %489 = vmatprep.subr.bf16.mxu0 0
    %490 = vmatpush1.bf16.msra.mxu0 %v367
    %491 = vmatprep.subr.bf16.mxu0 0
    %492 = vmatpush1.bf16.msra.mxu0 %v368
    %493 = vmatprep.subr.bf16.mxu0 0
    %494 = vmatpush1.bf16.msra.mxu0 %v369
    %495 = vmatprep.subr.bf16.mxu0 0
    %496 = vmatpush1.bf16.msra.mxu0 %v370
    %497 = vmatprep.subr.bf16.mxu0 0
    %498 = vmatpush1.bf16.msra.mxu0 %v371
    %499 = vmatprep.subr.bf16.mxu0 0
    %500 = vmatpush1.bf16.msra.mxu0 %v372
    %501 = vmatprep.subr.bf16.mxu0 0
    %502 = vmatpush1.bf16.msra.mxu0 %v373
    %503 = vmatprep.subr.bf16.mxu0 0
    %504 = vmatpush1.bf16.msra.mxu0 %v374
    %505 = vmatprep.subr.bf16.mxu0 0
    %506 = vmatpush1.bf16.msra.mxu0 %v375
    %507 = vmatprep.subr.bf16.mxu0 0
    %508 = vmatpush1.bf16.msra.mxu0 %v376
    %509 = vmatprep.subr.bf16.mxu0 0
    %510 = vmatpush1.bf16.msra.mxu0 %v377
    %511 = vmatprep.subr.bf16.mxu0 0
    %512 = vmatpush1.bf16.msra.mxu0 %v378
    %513 = vmatprep.subr.bf16.mxu0 0
    %514 = vmatpush1.bf16.msra.mxu0 %v379
    %515 = vmatprep.subr.bf16.mxu0 0
    %516 = vmatpush1.bf16.msra.mxu0 %v380
    %517 = vmatprep.mubr.bf16.mxu0 %v51
    %518 = vmatmul.mubr.bf16.gmra.mrb[0].mxu0 %v50
    %v519 = vpop.f32.mrb[0].mxu0
    %v520 = vadd.f32 %v480, %v519
    %v521 = vpop.f32.mrb[0].mxu0
    %v522 = vpop.f32.mrb[0].mxu0
    %v523 = vpop.f32.mrb[0].mxu0
    %524 = vdwg.mxu0
    %525 = vmatprep.subr.bf16.mxu0 0
    %526 = vmatpush1.bf16.msra.mxu0 %v381
    %527 = vmatprep.subr.bf16.mxu0 0
    %528 = vmatpush1.bf16.msra.mxu0 %v382
    %529 = vmatprep.subr.bf16.mxu0 0
    %530 = vmatpush1.bf16.msra.mxu0 %v383
    %531 = vmatprep.subr.bf16.mxu0 0
    %532 = vmatpush1.bf16.msra.mxu0 %v384
    %533 = vmatprep.subr.bf16.mxu0 0
    %534 = vmatpush1.bf16.msra.mxu0 %v385
    %535 = vmatprep.subr.bf16.mxu0 0
    %536 = vmatpush1.bf16.msra.mxu0 %v386
    %537 = vmatprep.subr.bf16.mxu0 0
    %538 = vmatpush1.bf16.msra.mxu0 %v387
    %539 = vmatprep.subr.bf16.mxu0 0
    %540 = vmatpush1.bf16.msra.mxu0 %v388
    %541 = vmatprep.subr.bf16.mxu0 0
    %542 = vmatpush1.bf16.msra.mxu0 %v389
    %543 = vmatprep.subr.bf16.mxu0 0
    %544 = vmatpush1.bf16.msra.mxu0 %v390
    %545 = vmatprep.subr.bf16.mxu0 0
    %546 = vmatpush1.bf16.msra.mxu0 %v391
    %547 = vmatprep.subr.bf16.mxu0 0
    %548 = vmatpush1.bf16.msra.mxu0 %v392
    %549 = vmatprep.subr.bf16.mxu0 0
    %550 = vmatpush1.bf16.msra.mxu0 %v393
    %551 = vmatprep.subr.bf16.mxu0 0
    %552 = vmatpush1.bf16.msra.mxu0 %v394
    %553 = vmatprep.subr.bf16.mxu0 0
    %554 = vmatpush1.bf16.msra.mxu0 %v395
    %555 = vmatprep.subr.bf16.mxu0 0
    %556 = vmatpush1.bf16.msra.mxu0 %v396
    %557 = vmatprep.mubr.bf16.mxu0 %v53
    %558 = vmatmul.mubr.bf16.gmra.mrb[0].mxu0 %v52
    %v559 = vpop.f32.mrb[0].mxu0
    %v560 = vadd.f32 %v520, %v559
    %v561 = vpop.f32.mrb[0].mxu0
    %v562 = vpop.f32.mrb[0].mxu0
    %v563 = vpop.f32.mrb[0].mxu0
    %564 = vdwg.mxu0
    %565 = vst [vmem:[#allocation7] sm:$0xff] %v560
    // Predicated region
    $region22: #{tpu_custom_call.1} parent=1 // pred_check
      _
    $region23: #{tpu_custom_call.1} parent=1 // pred_check_branch
      %567 = sbr.rel (0) target = $region25
    $region24: #{tpu_custom_call.1} parent=1 // pred_region
      %s569 = ssub.s32 128, 128
      %570 = vsyncadd [#allocation4], %s569
      %s572 = sshll.u32 [#allocation7], 4
      %s573 = int_to_ptr.vmem [resolvable:$true] %s572
      %575 = dma.vmem_to_hbm [thread:$0]  %s573, 128, %s3, [#allocation4]
    $region25: #{tpu_custom_call.1} parent=1 // pred_fallthru
      _
    // Predicated region
    $region26: #{tpu_custom_call.1} parent=1 // pred_check
      _
    $region27: #{tpu_custom_call.1} parent=1 // pred_check_branch
      %577 = sbr.rel (0) target = $region29
    $region28: #{tpu_custom_call.1} parent=1 // pred_region
      %578 = dma.done [#allocation4], 128
    $region29: #{tpu_custom_call.1} parent=1 // pred_fallthru
      _
    %579 = vsyncpa [#allocation3], 1
    %580 = vsyncpa [#allocation6], 1
    %581 = vsyncpa [#allocation4], 1

</llo_original>
